<compile_context>
chip_gen: v5e
topology: v5e:2x2
jax: 0.10.0
libtpu: 0.0.40
codegen_flags: <defaults>
</compile_context>

<pallas_src>
import jax
import jax.numpy as jnp
from jax.experimental import pallas as pl
from jax.experimental.pallas import tpu as pltpu

FEAT = 16
LANES = 128
PACK = LANES // FEAT          # 8 feature-rows packed per lane-dense row
ROWS_PER_TILE = 2048          # lane-dense rows per grid step (2048*128*4 B = 1 MiB/buffer)


def _weighted_sum_kernel(x_ref, v_ref, o_ref, acc_ref):
    # x_ref: (rt, 128) f32 VMEM tile of lane-dense x
    # v_ref: (1, 128) f32 VMEM, resident across the grid (index_map -> (0, 0))
    # o_ref: (1,) f32 SMEM output scalar
    # acc_ref: (1,) f32 SMEM accumulator scratch
    i = pl.program_id(0)

    @pl.when(i == 0)
    def _():
        acc_ref[0] = jnp.float32(0.0)

    # Pure VPU multiply + cross-lane reduce; no MXU, no transposes.
    acc_ref[0] += jnp.sum(x_ref[...] * v_ref[...])

    @pl.when(i == pl.num_programs(0) - 1)
    def _():
        o_ref[0] = acc_ref[0]


@jax.jit
def chain_linear_sum(x, w1, w2, w3):
    """x: (..., 16) f32; w1/w2/w3: (16, 16) f32 in torch Linear layout (out, in)."""
    x2 = x.reshape(-1, FEAT)
    B = x2.shape[0]

    # Fold the three layers + the output-feature sum into one length-16 vector
    # (three matvecs instead of two 16x16 matmuls + reduce).
    v = ((jnp.ones((1, FEAT), jnp.float32) @ w3) @ w2) @ w1        # (1, 16)
    v_lane = jnp.tile(v.reshape(FEAT), PACK).reshape(1, LANES)     # (1, 128)

    # Lane-dense layout: pack 8 consecutive feature-rows into one 128-lane row.
    rows = pl.cdiv(B, PACK)
    if rows <= ROWS_PER_TILE:
        rt = rows
        rows_padded = rows
    else:
        rt = ROWS_PER_TILE
        rows_padded = rt * pl.cdiv(rows, rt)
    b_padded = rows_padded * PACK
    if b_padded != B:
        # Zero rows contribute exactly 0 to the sum.
        x2 = jnp.pad(x2, ((0, b_padded - B), (0, 0)))
    x_lane = x2.reshape(rows_padded, LANES)

    grid = (rows_padded // rt,)

    out = pl.pallas_call(
        _weighted_sum_kernel,
        out_shape=jax.ShapeDtypeStruct((1,), jnp.float32),
        grid_spec=pltpu.PrefetchScalarGridSpec(
            num_scalar_prefetch=0,
            grid=grid,
            in_specs=[
                pl.BlockSpec((rt, LANES), lambda i: (i, 0)),   # streamed x tiles
                pl.BlockSpec((1, LANES), lambda i: (0, 0)),    # v stays resident
            ],
            out_specs=pl.BlockSpec(memory_space=pltpu.MemorySpace.SMEM),
            scratch_shapes=[pltpu.SMEM((1,), jnp.float32)],
        ),
        compiler_params=pltpu.CompilerParams(
            dimension_semantics=("arbitrary",),   # grid axis is a reduction
        ),
    )(x_lane, v_lane)
    return out[0]


if __name__ == "__main__":
    key = jax.random.PRNGKey(0)
    k_x, k1, k2, k3 = jax.random.split(key, 4)

    bound = 1.0 / (FEAT ** 0.5)
    # Deterministic init mimicking torch.nn.Linear default U(-1/sqrt(in), 1/sqrt(in)).
    w1 = jax.random.uniform(k1, (FEAT, FEAT), jnp.float32, -bound, bound)
    w2 = jax.random.uniform(k2, (FEAT, FEAT), jnp.float32, -bound, bound)
    w3 = jax.random.uniform(k3, (FEAT, FEAT), jnp.float32, -bound, bound)

    # Small batch of 16-feature vectors.
    x = jax.random.normal(k_x, (8, FEAT), jnp.float32)

    result = jax.block_until_ready(chain_linear_sum(x, w1, w2, w3))

    # Pure-JAX reference: exactly the PyTorch module's math (x @ W.T chain, then sum).
    ref = jnp.sum(((x @ w1.T) @ w2.T) @ w3.T)
    assert jnp.allclose(result, ref, rtol=1e-5, atol=1e-4), (result, ref)

    print("KERNEL_OK")
</pallas_src>

<mosaic_0001>
module attributes {stable_mosaic.version = 11 : i64} {
  func.func @_weighted_sum_kernel(%arg0: i32, %arg1: memref<1x128xf32, #tpu.memory_space<vmem>>, %arg2: memref<1x128xf32, #tpu.memory_space<vmem>>, %arg3: memref<1xf32, #tpu.memory_space<smem>>, %arg4: memref<1xf32, #tpu.memory_space<smem>>) attributes {dimension_semantics = [#tpu.dimension_semantics<arbitrary>], iteration_bounds = array<i64: 1>, scalar_prefetch = 0 : i64, scratch_operands = 1 : i64, tpu.core_type = #tpu.core_type<tc>, window_params = [{transform_indices = @transform_0, window_bounds = array<i64: 1, 128>}, {pipeline_mode = #tpu.pipeline_mode<synchronous>, transform_indices = @transform_1, window_bounds = array<i64: 1, 128>}, {transform_indices = @transform_2, window_bounds = array<i64: 1>}]} {
    %c0_i32 = arith.constant 0 : i32
    %0 = arith.cmpi eq, %arg0, %c0_i32 : i32
    %1 = arith.extui %0 : i1 to i32
    %c0_i32_0 = arith.constant 0 : i32
    %2 = arith.cmpi ne, %1, %c0_i32_0 : i32
    scf.if %2 {
      %cst_8 = arith.constant 0.000000e+00 : f32
      %c0_9 = arith.constant 0 : index
      %16 = memref.load %arg4[%c0_9] : memref<1xf32, #tpu.memory_space<smem>>
      memref.store %cst_8, %arg4[%c0_9] : memref<1xf32, #tpu.memory_space<smem>>
    } else {
    }
    %c0 = arith.constant 0 : index
    %3 = memref.load %arg4[%c0] : memref<1xf32, #tpu.memory_space<smem>>
    %c0_1 = arith.constant 0 : index
    %c0_2 = arith.constant 0 : index
    %4 = vector.load %arg1[%c0_1, %c0_2] : memref<1x128xf32, #tpu.memory_space<vmem>>, vector<1x128xf32>
    %c0_3 = arith.constant 0 : index
    %c0_4 = arith.constant 0 : index
    %5 = vector.load %arg2[%c0_3, %c0_4] : memref<1x128xf32, #tpu.memory_space<vmem>>, vector<1x128xf32>
    %6 = arith.mulf %4, %5 : vector<1x128xf32>
    %7 = vector.shape_cast %6 : vector<1x128xf32> to vector<1x1x128xf32>
    %cst = arith.constant dense<0.000000e+00> : vector<1xf32>
    %8 = vector.multi_reduction <add>, %7, %cst [1, 2] : vector<1x1x128xf32> to vector<1xf32>
    %9 = vector.shape_cast %8 : vector<1xf32> to vector<1x1x1xf32>
    %10 = vector.extract %9[0, 0, 0] : f32 from vector<1x1x1xf32>
    %11 = arith.addf %3, %10 : f32
    %c0_5 = arith.constant 0 : index
    %12 = memref.load %arg4[%c0_5] : memref<1xf32, #tpu.memory_space<smem>>
    memref.store %11, %arg4[%c0_5] : memref<1xf32, #tpu.memory_space<smem>>
    %c0_i32_6 = arith.constant 0 : i32
    %13 = arith.cmpi eq, %arg0, %c0_i32_6 : i32
    %14 = arith.extui %13 : i1 to i32
    %c0_i32_7 = arith.constant 0 : i32
    %15 = arith.cmpi ne, %14, %c0_i32_7 : i32
    scf.if %15 {
      %c0_8 = arith.constant 0 : index
      %16 = memref.load %arg4[%c0_8] : memref<1xf32, #tpu.memory_space<smem>>
      %c0_9 = arith.constant 0 : index
      %17 = memref.load %arg3[%c0_9] : memref<1xf32, #tpu.memory_space<smem>>
      memref.store %16, %arg3[%c0_9] : memref<1xf32, #tpu.memory_space<smem>>
    } else {
    }
    return
  }
  func.func @transform_0(%arg0: i32) -> (i32, i32) {
    %c0_i32 = arith.constant 0 : i32
    %c0_i32_0 = arith.constant 0 : i32
    return %arg0, %c0_i32 : i32, i32
  }
  func.func @transform_1(%arg0: i32) -> (i32, i32) {
    %c0_i32 = arith.constant 0 : i32
    %c0_i32_0 = arith.constant 0 : i32
    %c0_i32_1 = arith.constant 0 : i32
    return %c0_i32, %c0_i32_0 : i32, i32
  }
  func.func @transform_2(%arg0: i32) -> i32 {
    %c0_i32 = arith.constant 0 : i32
    %c0_i32_0 = arith.constant 0 : i32
    return %c0_i32 : i32
  }
}

</mosaic_0001>

<llo_original>
// kernel: tile.7
$region0: #{tile.7}
  %s0 = inlined_call_operand.vmem [shape: f32[8,16], index: 0, kind: input, shape index: {}]
  %s1 = inlined_call_operand.vmem [shape: f32[1,128], index: 1, kind: output, shape index: {}]
  $region1: #{tile.7} parent=0
    #allocation0 [shape = 'u8[4096]{0}', space=vmem, size = 0x1000, scoped, tag = 'scoped mem for output reshape']
    %v2 = vld [vmem:[%s0] sm:$0x1]
    %vm3 = vcmask 130048
    %4 = vst.msk [vmem:[#allocation0] sm:$0x1] %vm3, %v2
    %s5 = scalar_lea.vmem %s0, 7
    %v6 = vld [vmem:[%s5] sm:$0x1]
    %7 = vrot.lane.b32.xlu0 %v6, 112
    %v8 = vpop.permute.xlu0 %7
    %vm9 = vcmask 1048448
    %10 = vst.msk [vmem:[#allocation0] sm:$0x1] %vm9, %v8
    %s11 = scalar_lea.vmem %s0, 6
    %v12 = vld [vmem:[%s11] sm:$0x1]
    %13 = vrot.lane.b32.xlu0 %v12, 96
    %v14 = vpop.permute.xlu0 %13
    %vm15 = vcmask 917248
    %16 = vst.msk [vmem:[#allocation0] sm:$0x1] %vm15, %v14
    %s17 = scalar_lea.vmem %s0, 5
    %v18 = vld [vmem:[%s17] sm:$0x1]
    %19 = vrot.lane.b32.xlu0 %v18, 80
    %v20 = vpop.permute.xlu0 %19
    %vm21 = vcmask 786048
    %22 = vst.msk [vmem:[#allocation0] sm:$0x1] %vm21, %v20
    %s23 = scalar_lea.vmem %s0, 4
    %v24 = vld [vmem:[%s23] sm:$0x1]
    %25 = vrot.lane.b32.xlu0 %v24, 64
    %v26 = vpop.permute.xlu0 %25
    %vm27 = vcmask 654848
    %28 = vst.msk [vmem:[#allocation0] sm:$0x1] %vm27, %v26
    %s29 = scalar_lea.vmem %s0, 3
    %v30 = vld [vmem:[%s29] sm:$0x1]
    %31 = vrot.lane.b32.xlu0 %v30, 48
    %v32 = vpop.permute.xlu0 %31
    %vm33 = vcmask 523648
    %34 = vst.msk [vmem:[#allocation0] sm:$0x1] %vm33, %v32
    %s35 = scalar_lea.vmem %s0, 2
    %v36 = vld [vmem:[%s35] sm:$0x1]
    %37 = vrot.lane.b32.xlu0 %v36, 32
    %v38 = vpop.permute.xlu0 %37
    %vm39 = vcmask 392448
    %40 = vst.msk [vmem:[#allocation0] sm:$0x1] %vm39, %v38
    %s41 = scalar_lea.vmem %s0, 1
    %v42 = vld [vmem:[%s41] sm:$0x1]
    %43 = vrot.lane.b32.xlu0 %v42, 16
    %v44 = vpop.permute.xlu0 %43
    %vm45 = vcmask 261248
    %46 = vst.msk [vmem:[#allocation0] sm:$0x1] %vm45, %v44
    %s48 = ssub.s32 2, 1
    %v49 = vld [vmem:[#allocation0] sm:%s48]
    %s51 = ssub.s32 2, 1
    %52 = vst [vmem:[%s1] sm:%s51] %v49

// kernel: tile.6
$region0: #{tile.6}
  #allocation0 [shape = 's32[1]{0}', space=sflag, size = 0x4, scoped, tag = 'scoped memory for tile.6']
  %s0 = inlined_call_operand.vmem [shape: f32[16], index: 0, kind: input, shape index: {}]
  %s1 = inlined_call_operand.vmem [shape: f32[8,16], index: 1, kind: output, shape index: {}]
  // Predicated region
  $region2: #{tile.6} parent=0 // pred_check
    _
  $region3: #{tile.6} parent=0 // pred_check_branch
    %3 = sbr.rel (0) target = $region5
  $region4: #{tile.6} parent=0 // pred_region
    _
  $region5: #{tile.6} parent=0 // pred_fallthru
    _
  %v4 = vld [vmem:[%s0] ss:$0 sm:$0xff]
  %5 = vst [vmem:[%s1] sm:$0xff] %v4

// kernel: chain_linear_sum.1
$region0: #{chain_linear_sum.1}
  #allocation0 [shape = 'u32[]', space=smem, size = 0x4, offset = 0x4, fixed_abs, tag = 'smem constant byte address 0x4 - core index']
  #allocation1 [shape = 'u32[72,128]{1,0:T(1,128)}', space=vmem, size = 0x9000, scoped, tag = 'internal scratch']
  #allocation2 [shape = 'f32[1]{0:T(128)}', space=smem, size = 0x200, scoped, tag = 'scratch operand']
  %s0 = inlined_call_operand.vmem [shape: f32[1,128], index: 0, kind: input, shape index: {}]
  %s1 = inlined_call_operand.vmem [shape: f32[1,128], index: 1, kind: input, shape index: {}]
  %s2 = inlined_call_operand.hbm [shape: f32[1], index: 2, kind: output, shape index: {}]
  %s3 = sld [smem:[#allocation0]]
  $region26: #{chain_linear_sum.1} parent=0
    _
  %s5 = ssub.s32 1, %s3
  %s6 = scalar_select 0, %s5, %s3
  $region1: #{chain_linear_sum.1} parent=0
    #allocation3 [shape = 'u8[512]{0}', space=smem, size = 0x200, scoped, tag = 'output window, operand 0, single buffered']
    #allocation4 [shape = 's32[1]{0}', space=sflag, size = 0x4, scoped, tag = 'scoped memory for chain_linear_sum.1']
    %7 = vsyncpa [#allocation4], 0
    // Predicated region
    $region2: #{chain_linear_sum.1} parent=1 // pred_check
      _
    $region3: #{chain_linear_sum.1} parent=1 // pred_check_branch
      %9 = sbr.rel (0) target = $region5
    $region4: #{chain_linear_sum.1} parent=1 // pred_region
      _
    $region5: #{chain_linear_sum.1} parent=1 // pred_fallthru
      _
    // Predicated region
    $region6: #{chain_linear_sum.1} parent=1 // pred_check
      _
    $region7: #{chain_linear_sum.1} parent=1 // pred_check_branch
      %11 = sbr.rel (0) target = $region9
    $region8: #{chain_linear_sum.1} parent=1 // pred_region
      _
    $region9: #{chain_linear_sum.1} parent=1 // pred_fallthru
      _
    %p12 = scmp.eq.s32.totalorder 0, 0
    // Predicated region
    $region10: #{chain_linear_sum.1} parent=1 // pred_check
      %p13 = pneg %p12
    $region11: #{chain_linear_sum.1} parent=1 // pred_check_branch
      %15 = sbr.rel (%p13) target = $region13
    $region12: #{chain_linear_sum.1} parent=1 // pred_region
      %s16 = scalar_lea.smem [#allocation2], 0
      %17 = sst [smem:[%s16]] 0.0
    $region13: #{chain_linear_sum.1} parent=1 // pred_fallthru
      _
    %s18 = sld [smem:[#allocation2]]
    %v19 = vld [vmem:[%s0] sm:$0x1]
    %v20 = vld [vmem:[%s1] sm:$0x1]
    %v21 = vmul.f32 %v19, %v20
    %vm22 = vcmask 1040384
    %v23 = vsel %vm22, %v21, 0.0
    %24 = vadd.xlane.f32.xlu0 %v23
    %v25 = vpop.xlane.xlu0 %24
    %v26 = vrot.slane %v25, 4
    %v27 = vadd.f32 %v25, %v26
    %v28 = vrot.slane %v27, 2
    %v29 = vadd.f32 %v27, %v28
    %v30 = vrot.slane %v29, 1
    %v31 = vadd.f32 %v29, %v30
    %s32 = vtos %v31
    %s33 = sadd.f32 %s18, %s32
    %s34 = scalar_lea.smem [#allocation2], 0
    %35 = sst [smem:[%s34]] %s33
    // Predicated region
    $region14: #{chain_linear_sum.1} parent=1 // pred_check
      %p36 = pneg %p12
    $region15: #{chain_linear_sum.1} parent=1 // pred_check_branch
      %38 = sbr.rel (%p36) target = $region17
    $region16: #{chain_linear_sum.1} parent=1 // pred_region
      %s39 = sld [smem:[#allocation2]]
      %s40 = scalar_lea.smem [#allocation3], 0
      %41 = sst [smem:[%s40]] %s39
    $region17: #{chain_linear_sum.1} parent=1 // pred_fallthru
      _
    // Predicated region
    $region18: #{chain_linear_sum.1} parent=1 // pred_check
      _
    $region19: #{chain_linear_sum.1} parent=1 // pred_check_branch
      %43 = sbr.rel (0) target = $region21
    $region20: #{chain_linear_sum.1} parent=1 // pred_region
      %45 = vsyncadd [#allocation4], 0
      %s47 = sshll.u32 %s2, 4
      %s48 = int_to_ptr.hbm [resolvable:$true] %s47
      %50 = dma.smem_to_hbm [#allocation3], 16, %s48, [#allocation4]
    $region21: #{chain_linear_sum.1} parent=1 // pred_fallthru
      _
    // Predicated region
    $region22: #{chain_linear_sum.1} parent=1 // pred_check
      _
    $region23: #{chain_linear_sum.1} parent=1 // pred_check_branch
      %52 = sbr.rel (0) target = $region25
    $region24: #{chain_linear_sum.1} parent=1 // pred_region
      %54 = dma.done [#allocation4], 16
    $region25: #{chain_linear_sum.1} parent=1 // pred_fallthru
      _
    %55 = sfence
    %56 = vsyncpa [#allocation4], 1

</llo_original>
